<compile_context>
chip_gen: v7x
topology: tpu7x:2x2x1
jax: 0.10.0
libtpu: 0.0.40
codegen_flags: <defaults>
</compile_context>

<pallas_src>
import math
import jax
import jax.numpy as jnp
from jax.experimental import pallas as pl
from jax.experimental.pallas import tpu as pltpu

_BN_EPS = 1e-5
_LANE = 128      # lane (last-dim) granularity
_SUBLANE = 8     # sublane (second-to-last) granularity
_MIB = 1 << 20

# Budget for keeping the whole fused MLP resident in one kernel invocation.
# Chosen to be safe on v7x (64 MiB VMEM per TensorCore); v5e/v6e have 128 MiB.
_FUSED_VMEM_BUDGET = 40 * _MIB


# ------------------------------ small helpers ------------------------------ #

def _round_up(v, m):
    return ((v + m - 1) // m) * m


def _full_spec(shape):
    # Whole-array block (no grid): everything lives in VMEM for one invocation.
    return pl.BlockSpec(shape, lambda: (0,) * len(shape))


def _pick_tile(dim_pad, pref, granularity):
    """Largest power-of-two-ish tile <= pref that divides dim_pad (dim_pad is a
    multiple of `granularity`)."""
    t = pref
    while t > granularity and dim_pad % t != 0:
        t //= 2
    return min(t, dim_pad)


def _pick_tm(m):
    """Largest batch tile that keeps padding waste <= ~15% (avoids up-to-2x
    padded MXU work / DMA for awkward batch sizes)."""
    m8 = _round_up(m, _SUBLANE)
    for t in (512, 256, 128, 64, 32, 16, 8):
        if t > m8:
            continue
        waste = _round_up(m, t) - m
        if waste <= max(0.15 * m, 0.0):
            return t
    return _SUBLANE


def _vmem_limit(footprint_bytes):
    """Explicit scoped-VMEM limit: at least 32 MiB, capped to a v7x-safe 64 MiB."""
    return int(min(max(footprint_bytes + 4 * _MIB, 32 * _MIB), 64 * _MIB))


def _pad_weight(w):
    """(in, out) f32 -> zero-padded (in_pad, out_pad) bf16 for the MXU."""
    k, n = w.shape
    kp, np_ = _round_up(k, _LANE), _round_up(n, _LANE)
    out = jnp.zeros((kp, np_), jnp.float32).at[:k, :n].set(w)
    return out.astype(jnp.bfloat16)


def _pad_row_vec(v, pad_value=0.0):
    """(1, n) f32 -> (1, n_pad) f32, padded with pad_value."""
    n = v.shape[1]
    np_ = _round_up(n, _LANE)
    out = jnp.full((1, np_), pad_value, jnp.float32).at[:, :n].set(v)
    return out


# ------------------------------ fused MLP kernel ---------------------------- #

def _make_mlp_kernel(num_hidden_layers, n_real):
    """Fused kernel: (Linear -> BN(train) -> ReLU) x num_hidden_layers -> Linear.

    Ref layout: x, [w, b, gamma, beta] * num_hidden_layers, w_last, b_last, o.
    Intermediate activations stay in VMEM/vregs (traced values) — no HBM trips.
    """

    def kernel(*refs):
        idx = 0
        x_ref = refs[idx]; idx += 1
        h = x_ref[...]                       # bf16, (n_pad, d_in_pad)
        n_pad = h.shape[0]
        inv_n = 1.0 / float(n_real)

        if n_pad == n_real:
            row_mask = None
        else:
            row_ids = jax.lax.broadcasted_iota(jnp.int32, (n_pad, 1), 0)
            row_mask = (row_ids < n_real).astype(jnp.float32)

        for _ in range(num_hidden_layers):
            w_ref, b_ref, g_ref, be_ref = refs[idx:idx + 4]; idx += 4
            # MXU matmul: bf16 inputs, f32 accumulation.
            y = jnp.dot(h.astype(jnp.bfloat16), w_ref[...],
                        preferred_element_type=jnp.float32) + b_ref[...]
            # One-pass BN statistics over the *real* batch rows only
            # (padded rows carry y == bias and must not pollute the stats).
            ym = y if row_mask is None else y * row_mask
            s1 = jnp.sum(ym, axis=0, keepdims=True)
            s2 = jnp.sum(ym * y, axis=0, keepdims=True)
            mean = s1 * inv_n
            var = jnp.maximum(s2 * inv_n - mean * mean, 0.0)
            # Fold gamma into the inverse std (saves a full-slab VPU multiply);
            # rsqrt goes to the EUP slot.
            scale = g_ref[...] * jax.lax.rsqrt(var + _BN_EPS)
            h = jnp.maximum((y - mean) * scale + be_ref[...], 0.0)

        w_ref, b_ref = refs[idx:idx + 2]; idx += 2
        o_ref = refs[idx]
        o_ref[...] = jnp.dot(h.astype(jnp.bfloat16), w_ref[...],
                             preferred_element_type=jnp.float32) + b_ref[...]

    return kernel


def mlp_forward_fused(x_pad, layer_params, n_real, vmem_footprint):
    """One pallas_call for the whole MLP. layer_params: [(w,b,g,be)..., (w,b)]."""
    n_pad, _ = x_pad.shape
    num_hidden = len(layer_params) - 1
    d_out_pad = layer_params[-1][0].shape[1]

    flat_inputs = [x_pad]
    in_specs = [_full_spec(x_pad.shape)]
    for params in layer_params:
        for arr in params:
            flat_inputs.append(arr)
            in_specs.append(_full_spec(arr.shape))

    return pl.pallas_call(
        _make_mlp_kernel(num_hidden, n_real),
        out_shape=jax.ShapeDtypeStruct((n_pad, d_out_pad), jnp.float32),
        in_specs=in_specs,
        out_specs=_full_spec((n_pad, d_out_pad)),
        compiler_params=pltpu.CompilerParams(
            vmem_limit_bytes=_vmem_limit(vmem_footprint)),
    )(*flat_inputs)


# --------------------------- tiled plain Linear ----------------------------- #

def _linear_tiled_kernel(x_ref, w_ref, b_ref, o_ref, acc_ref):
    @pl.when(pl.program_id(2) == 0)
    def _():
        acc_ref[...] = jnp.zeros_like(acc_ref)

    acc_ref[...] += jnp.dot(x_ref[...].astype(jnp.bfloat16), w_ref[...],
                            preferred_element_type=jnp.float32)

    @pl.when(pl.program_id(2) == pl.num_programs(2) - 1)
    def _():
        o_ref[...] = acc_ref[...] + b_ref[...]


def linear_tiled(x, w_pad, b_pad):
    """y = x @ W + b with a (batch, out, K) grid; x may be unpadded f32."""
    M, K = x.shape
    K_pad, N_pad = w_pad.shape

    tm = _pick_tm(M)
    M_pad = _round_up(M, tm)
    tn = _pick_tile(N_pad, 512, _LANE)
    tk = _pick_tile(K_pad, 1024, _LANE)

    # Avoid an extra HBM round-trip of x when it is already tile-aligned:
    # pass it straight through (f32) and cast to bf16 inside the kernel.
    if M_pad == M and K == K_pad:
        x_in = x
    else:
        x_in = jnp.zeros((M_pad, K_pad), jnp.bfloat16).at[:M, :K].set(
            x.astype(jnp.bfloat16))

    # Cap the double-buffered working set (safe against v7x's 64 MiB VMEM and
    # the 16/32 MiB default scoped limits on all chips).
    x_bytes = x_in.dtype.itemsize

    def working_set(tm_, tn_, tk_):
        return (2 * (tm_ * tk_ * x_bytes + tk_ * tn_ * 2 + tn_ * 4)
                + 2 * tm_ * tn_ * 4 + tm_ * tn_ * 4)

    cap = 20 * _MIB
    while working_set(tm, tn, tk) > cap and tk > _LANE:
        tk //= 2
    while working_set(tm, tn, tk) > cap and tn > _LANE:
        tn //= 2

    grid = (M_pad // tm, N_pad // tn, K_pad // tk)
    return pl.pallas_call(
        _linear_tiled_kernel,
        out_shape=jax.ShapeDtypeStruct((M_pad, N_pad), jnp.float32),
        grid_spec=pltpu.PrefetchScalarGridSpec(
            num_scalar_prefetch=0,
            grid=grid,
            in_specs=[
                pl.BlockSpec((tm, tk), lambda i, j, k: (i, k)),
                pl.BlockSpec((tk, tn), lambda i, j, k: (k, j)),
                pl.BlockSpec((1, tn), lambda i, j, k: (0, j)),
            ],
            out_specs=pl.BlockSpec((tm, tn), lambda i, j, k: (i, j)),
            scratch_shapes=[pltpu.VMEM((tm, tn), jnp.float32)],
        ),
        compiler_params=pltpu.CompilerParams(
            dimension_semantics=("parallel", "parallel", "arbitrary"),
            vmem_limit_bytes=_vmem_limit(working_set(tm, tn, tk))),
    )(x_in, w_pad, b_pad)


# ----------------- feature-tiled BN + ReLU (fallback path) ------------------ #

def _make_bn_relu_kernel(n_real):
    def kernel(y_ref, g_ref, be_ref, o_ref):
        y = y_ref[...]
        n_pad = y.shape[0]
        inv_n = 1.0 / float(n_real)
        if n_pad == n_real:
            ym = y
        else:
            row_ids = jax.lax.broadcasted_iota(jnp.int32, (n_pad, 1), 0)
            ym = y * (row_ids < n_real).astype(jnp.float32)
        s1 = jnp.sum(ym, axis=0, keepdims=True)
        s2 = jnp.sum(ym * y, axis=0, keepdims=True)
        mean = s1 * inv_n
        var = jnp.maximum(s2 * inv_n - mean * mean, 0.0)
        scale = g_ref[...] * jax.lax.rsqrt(var + _BN_EPS)
        o_ref[...] = jnp.maximum((y - mean) * scale + be_ref[...], 0.0)
    return kernel


def bn_relu_pallas(y, gamma, beta, n_real):
    """BatchNorm1d (training stats over the first n_real rows) + ReLU,
    tiled over the feature (lane) dimension — each block sees the full batch."""
    M_pad, N_pad = y.shape
    tf = _pick_tile(N_pad, 512, _LANE)
    footprint = 4 * M_pad * tf * 4 + 4 * tf * 4
    return pl.pallas_call(
        _make_bn_relu_kernel(n_real),
        out_shape=jax.ShapeDtypeStruct((M_pad, N_pad), jnp.float32),
        grid_spec=pltpu.PrefetchScalarGridSpec(
            num_scalar_prefetch=0,
            grid=(N_pad // tf,),
            in_specs=[
                pl.BlockSpec((M_pad, tf), lambda j: (0, j)),
                pl.BlockSpec((1, tf), lambda j: (0, j)),
                pl.BlockSpec((1, tf), lambda j: (0, j)),
            ],
            out_specs=pl.BlockSpec((M_pad, tf), lambda j: (0, j)),
        ),
        compiler_params=pltpu.CompilerParams(
            dimension_semantics=("parallel",),
            vmem_limit_bytes=_vmem_limit(footprint)),
    )(y, gamma, beta)


# ------------------------- parameter init + module -------------------------- #

def _init_linear_params(key, in_dim, out_dim):
    """PyTorch nn.Linear default init: U(-1/sqrt(in_dim), 1/sqrt(in_dim))."""
    kw, kb = jax.random.split(key)
    bound = 1.0 / math.sqrt(in_dim)
    # Stored pre-transposed as (in_dim, out_dim) so the kernel does y = x @ W + b.
    w = jax.random.uniform(kw, (in_dim, out_dim), jnp.float32, -bound, bound)
    b = jax.random.uniform(kb, (1, out_dim), jnp.float32, -bound, bound)
    return w, b


class LinearlayerPallas:
    """JAX/Pallas port of the PyTorch Linearlayer module."""

    def __init__(self, num_layers, input_dim, hidden_dim, output_dim, key,
                 fused_vmem_budget_bytes=_FUSED_VMEM_BUDGET):
        if num_layers < 1:
            raise ValueError("number of layers should be positive!")
        self.num_layers = num_layers
        self.linear_or_not = num_layers == 1
        self.input_dim = input_dim
        self.output_dim = output_dim
        self.fused_vmem_budget_bytes = fused_vmem_budget_bytes

        if self.linear_or_not:
            w, b = _init_linear_params(key, input_dim, output_dim)
            self.w_pad = _pad_weight(w)          # bf16 (K_pad, N_pad)
            self.b_pad = _pad_row_vec(b)         # f32  (1, N_pad)
        else:
            keys = jax.random.split(key, num_layers)
            dims = [input_dim] + [hidden_dim] * (num_layers - 1) + [output_dim]
            self.layers = []
            for i in range(num_layers):
                w, b = _init_linear_params(keys[i], dims[i], dims[i + 1])
                wp, bp = _pad_weight(w), _pad_row_vec(b)
                if i < num_layers - 1:
                    h_pad = _round_up(dims[i + 1], _LANE)
                    gamma = jnp.ones((1, h_pad), jnp.float32)   # BN defaults
                    beta = jnp.zeros((1, h_pad), jnp.float32)
                    self.layers.append((wp, bp, gamma, beta))
                else:
                    self.layers.append((wp, bp))

    def _fused_footprint(self, n_pad):
        """Approximate resident VMEM footprint of the fused kernel (bytes)."""
        param_bytes = sum(a.size * a.dtype.itemsize
                          for layer in self.layers for a in layer)
        d_in_pad = self.layers[0][0].shape[0]
        d_out_pad = self.layers[-1][0].shape[1]
        widest = max([d_in_pad, d_out_pad] +
                     [w.shape[1] for w, *_ in self.layers])
        x_bytes = n_pad * d_in_pad * 2
        out_bytes = n_pad * d_out_pad * 4
        act_bytes = 3 * n_pad * widest * 4        # ~live f32 activation slabs
        return 2 * (param_bytes + x_bytes + out_bytes) + act_bytes

    def __call__(self, x):
        n = x.shape[0]
        if self.linear_or_not:
            out = linear_tiled(x, self.w_pad, self.b_pad)
            return out[:n, :self.output_dim]

        d_in_pad = self.layers[0][0].shape[0]
        n_pad = _round_up(n, _SUBLANE)
        footprint = self._fused_footprint(n_pad)

        if footprint <= self.fused_vmem_budget_bytes:
            # Fully fused: one pallas_call, activations never leave VMEM.
            x_pad = jnp.zeros((n_pad, d_in_pad), jnp.bfloat16).at[
                :n, :self.input_dim].set(x.astype(jnp.bfloat16))
            out_pad = mlp_forward_fused(x_pad, self.layers, n, footprint)
            return out_pad[:n, :self.output_dim]

        # Large-footprint fallback (e.g. v7x's 64 MiB VMEM): per-layer tiled
        # matmuls (megacore-parallel grids) + feature-tiled BN/ReLU kernels.
        h = x
        for (w, b, g, be) in self.layers[:-1]:
            y = linear_tiled(h, w, b)
            h = bn_relu_pallas(y, g, be, n)
        w, b = self.layers[-1]
        out = linear_tiled(h, w, b)
        return out[:n, :self.output_dim]


# ---------------------------- pure-JAX reference ---------------------------- #

def _reference_forward(mod, x):
    """Mirrors the kernel math (same padded params, bf16 matmul inputs),
    but uses the straightforward two-pass BatchNorm formulation."""
    if mod.linear_or_not:
        K_pad = mod.w_pad.shape[0]
        x_p = jnp.zeros((x.shape[0], K_pad), jnp.float32).at[
            :, :mod.input_dim].set(x)
        y = jnp.dot(x_p.astype(jnp.bfloat16), mod.w_pad,
                    preferred_element_type=jnp.float32) + mod.b_pad
        return y[:, :mod.output_dim]

    d_in_pad = mod.layers[0][0].shape[0]
    h = jnp.zeros((x.shape[0], d_in_pad), jnp.float32).at[
        :, :mod.input_dim].set(x)
    for w, b, g, be in mod.layers[:-1]:
        y = jnp.dot(h.astype(jnp.bfloat16), w,
                    preferred_element_type=jnp.float32) + b
        mean = jnp.mean(y, axis=0, keepdims=True)
        var = jnp.mean((y - mean) ** 2, axis=0, keepdims=True)
        h = jnp.maximum((y - mean) * jax.lax.rsqrt(var + _BN_EPS) * g + be, 0.0)
    w, b = mod.layers[-1]
    y = jnp.dot(h.astype(jnp.bfloat16), w,
                preferred_element_type=jnp.float32) + b
    return y[:, :mod.output_dim]


# ----------------------------------- main ----------------------------------- #

if __name__ == "__main__":
    key = jax.random.PRNGKey(0)
    k_x, k_x2, k_mlp, k_lin = jax.random.split(key, 4)

    batch, input_dim, hidden_dim, output_dim = 8, 16, 32, 8
    num_layers = 3

    x = jax.random.normal(k_x, (batch, input_dim), jnp.float32)

    mlp = LinearlayerPallas(num_layers, input_dim, hidden_dim, output_dim, k_mlp)

    # 1) Multi-layer path: single fused pallas_call (Linear->BN->ReLU x2, Linear).
    out = jax.block_until_ready(mlp(x))
    assert out.shape == (batch, output_dim)
    ref = jax.block_until_ready(_reference_forward(mlp, x))
    assert jnp.allclose(out, ref, rtol=1e-2, atol=1e-2), "fused MLP mismatch"

    # 1b) Fused path with a non-multiple-of-8 batch (exercises BN row masking).
    x2 = jax.random.normal(k_x2, (batch + 2, input_dim), jnp.float32)
    out2 = jax.block_until_ready(mlp(x2))
    assert out2.shape == (batch + 2, output_dim)
    ref2 = jax.block_until_ready(_reference_forward(mlp, x2))
    assert jnp.allclose(out2, ref2, rtol=1e-2, atol=1e-2), "masked MLP mismatch"

    # 2) Forced large-footprint fallback path (tiled linears + BN/ReLU kernels).
    mlp.fused_vmem_budget_bytes = 0
    out3 = jax.block_until_ready(mlp(x))
    assert jnp.allclose(out3, ref, rtol=1e-2, atol=1e-2), "layered MLP mismatch"
    mlp.fused_vmem_budget_bytes = _FUSED_VMEM_BUDGET

    # 3) Single-layer path: tiled Linear kernel with parallel/arbitrary grid.
    lin = LinearlayerPallas(1, input_dim, hidden_dim, output_dim, k_lin)
    out1 = jax.block_until_ready(lin(x))
    assert out1.shape == (batch, output_dim)
    ref1 = jax.block_until_ready(_reference_forward(lin, x))
    assert jnp.allclose(out1, ref1, rtol=1e-2, atol=1e-2), "linear mismatch"

    print("KERNEL_OK")
</pallas_src>

<mosaic_0001>
module attributes {stable_mosaic.version = 11 : i64} {
  func.func @kernel(%arg0: memref<8x128xbf16, #tpu.memory_space<vmem>>, %arg1: memref<128x128xbf16, #tpu.memory_space<vmem>>, %arg2: memref<1x128xf32, #tpu.memory_space<vmem>>, %arg3: memref<1x128xf32, #tpu.memory_space<vmem>>, %arg4: memref<1x128xf32, #tpu.memory_space<vmem>>, %arg5: memref<128x128xbf16, #tpu.memory_space<vmem>>, %arg6: memref<1x128xf32, #tpu.memory_space<vmem>>, %arg7: memref<1x128xf32, #tpu.memory_space<vmem>>, %arg8: memref<1x128xf32, #tpu.memory_space<vmem>>, %arg9: memref<128x128xbf16, #tpu.memory_space<vmem>>, %arg10: memref<1x128xf32, #tpu.memory_space<vmem>>, %arg11: memref<8x128xf32, #tpu.memory_space<vmem>>) attributes {dimension_semantics = [], scalar_prefetch = 0 : i64, scratch_operands = 0 : i64, tpu.core_type = #tpu.core_type<tc>} {
    %c0 = arith.constant 0 : index
    %c0_0 = arith.constant 0 : index
    %0 = vector.load %arg0[%c0, %c0_0] : memref<8x128xbf16, #tpu.memory_space<vmem>>, vector<8x128xbf16>
    %c0_1 = arith.constant 0 : index
    %c0_2 = arith.constant 0 : index
    %1 = vector.load %arg1[%c0_1, %c0_2] : memref<128x128xbf16, #tpu.memory_space<vmem>>, vector<128x128xbf16>
    %cst = arith.constant dense<0.000000e+00> : vector<8x128xf32>
    %2 = tpu.matmul %0, %1, %cst {dimension_numbers = #tpu.dot_dimension_numbers<[1], [0], [0], [1], [0, 0, 1, 1], [], []>} : vector<8x128xbf16>, vector<128x128xbf16>, vector<8x128xf32> -> vector<8x128xf32>
    %c0_3 = arith.constant 0 : index
    %c0_4 = arith.constant 0 : index
    %3 = vector.load %arg2[%c0_3, %c0_4] : memref<1x128xf32, #tpu.memory_space<vmem>>, vector<1x128xf32>
    %4 = vector.broadcast %3 : vector<1x128xf32> to vector<8x128xf32>
    %5 = arith.addf %2, %4 : vector<8x128xf32>
    %cst_5 = arith.constant dense<0.000000e+00> : vector<128xf32>
    %6 = vector.multi_reduction <add>, %5, %cst_5 [0] : vector<8x128xf32> to vector<128xf32>
    %7 = vector.shape_cast %6 : vector<128xf32> to vector<1x128xf32>
    %8 = arith.mulf %5, %5 : vector<8x128xf32>
    %cst_6 = arith.constant dense<0.000000e+00> : vector<128xf32>
    %9 = vector.multi_reduction <add>, %8, %cst_6 [0] : vector<8x128xf32> to vector<128xf32>
    %10 = vector.shape_cast %9 : vector<128xf32> to vector<1x128xf32>
    %cst_7 = arith.constant 1.250000e-01 : f32
    %11 = vector.broadcast %cst_7 : f32 to vector<1x128xf32>
    %12 = arith.mulf %7, %11 : vector<1x128xf32>
    %cst_8 = arith.constant 1.250000e-01 : f32
    %13 = vector.broadcast %cst_8 : f32 to vector<1x128xf32>
    %14 = arith.mulf %10, %13 : vector<1x128xf32>
    %15 = arith.mulf %12, %12 : vector<1x128xf32>
    %16 = arith.subf %14, %15 : vector<1x128xf32>
    %cst_9 = arith.constant 0.000000e+00 : f32
    %17 = vector.broadcast %cst_9 : f32 to vector<1x128xf32>
    %18 = arith.maximumf %16, %17 : vector<1x128xf32>
    %c0_10 = arith.constant 0 : index
    %c0_11 = arith.constant 0 : index
    %19 = vector.load %arg3[%c0_10, %c0_11] : memref<1x128xf32, #tpu.memory_space<vmem>>, vector<1x128xf32>
    %cst_12 = arith.constant 9.99999974E-6 : f32
    %20 = vector.broadcast %cst_12 : f32 to vector<1x128xf32>
    %21 = arith.addf %18, %20 : vector<1x128xf32>
    %22 = math.rsqrt %21 : vector<1x128xf32>
    %23 = arith.mulf %19, %22 : vector<1x128xf32>
    %24 = vector.broadcast %12 : vector<1x128xf32> to vector<8x128xf32>
    %25 = arith.subf %5, %24 : vector<8x128xf32>
    %26 = vector.broadcast %23 : vector<1x128xf32> to vector<8x128xf32>
    %27 = arith.mulf %25, %26 : vector<8x128xf32>
    %c0_13 = arith.constant 0 : index
    %c0_14 = arith.constant 0 : index
    %28 = vector.load %arg4[%c0_13, %c0_14] : memref<1x128xf32, #tpu.memory_space<vmem>>, vector<1x128xf32>
    %29 = vector.broadcast %28 : vector<1x128xf32> to vector<8x128xf32>
    %30 = arith.addf %27, %29 : vector<8x128xf32>
    %cst_15 = arith.constant 0.000000e+00 : f32
    %31 = vector.broadcast %cst_15 : f32 to vector<8x128xf32>
    %32 = arith.maximumf %30, %31 : vector<8x128xf32>
    %33 = arith.truncf %32 : vector<8x128xf32> to vector<8x128xbf16>
    %c0_16 = arith.constant 0 : index
    %c0_17 = arith.constant 0 : index
    %34 = vector.load %arg5[%c0_16, %c0_17] : memref<128x128xbf16, #tpu.memory_space<vmem>>, vector<128x128xbf16>
    %cst_18 = arith.constant dense<0.000000e+00> : vector<8x128xf32>
    %35 = tpu.matmul %33, %34, %cst_18 {dimension_numbers = #tpu.dot_dimension_numbers<[1], [0], [0], [1], [0, 0, 1, 1], [], []>} : vector<8x128xbf16>, vector<128x128xbf16>, vector<8x128xf32> -> vector<8x128xf32>
    %c0_19 = arith.constant 0 : index
    %c0_20 = arith.constant 0 : index
    %36 = vector.load %arg6[%c0_19, %c0_20] : memref<1x128xf32, #tpu.memory_space<vmem>>, vector<1x128xf32>
    %37 = vector.broadcast %36 : vector<1x128xf32> to vector<8x128xf32>
    %38 = arith.addf %35, %37 : vector<8x128xf32>
    %cst_21 = arith.constant dense<0.000000e+00> : vector<128xf32>
    %39 = vector.multi_reduction <add>, %38, %cst_21 [0] : vector<8x128xf32> to vector<128xf32>
    %40 = vector.shape_cast %39 : vector<128xf32> to vector<1x128xf32>
    %41 = arith.mulf %38, %38 : vector<8x128xf32>
    %cst_22 = arith.constant dense<0.000000e+00> : vector<128xf32>
    %42 = vector.multi_reduction <add>, %41, %cst_22 [0] : vector<8x128xf32> to vector<128xf32>
    %43 = vector.shape_cast %42 : vector<128xf32> to vector<1x128xf32>
    %cst_23 = arith.constant 1.250000e-01 : f32
    %44 = vector.broadcast %cst_23 : f32 to vector<1x128xf32>
    %45 = arith.mulf %40, %44 : vector<1x128xf32>
    %cst_24 = arith.constant 1.250000e-01 : f32
    %46 = vector.broadcast %cst_24 : f32 to vector<1x128xf32>
    %47 = arith.mulf %43, %46 : vector<1x128xf32>
    %48 = arith.mulf %45, %45 : vector<1x128xf32>
    %49 = arith.subf %47, %48 : vector<1x128xf32>
    %cst_25 = arith.constant 0.000000e+00 : f32
    %50 = vector.broadcast %cst_25 : f32 to vector<1x128xf32>
    %51 = arith.maximumf %49, %50 : vector<1x128xf32>
    %c0_26 = arith.constant 0 : index
    %c0_27 = arith.constant 0 : index
    %52 = vector.load %arg7[%c0_26, %c0_27] : memref<1x128xf32, #tpu.memory_space<vmem>>, vector<1x128xf32>
    %cst_28 = arith.constant 9.99999974E-6 : f32
    %53 = vector.broadcast %cst_28 : f32 to vector<1x128xf32>
    %54 = arith.addf %51, %53 : vector<1x128xf32>
    %55 = math.rsqrt %54 : vector<1x128xf32>
    %56 = arith.mulf %52, %55 : vector<1x128xf32>
    %57 = vector.broadcast %45 : vector<1x128xf32> to vector<8x128xf32>
    %58 = arith.subf %38, %57 : vector<8x128xf32>
    %59 = vector.broadcast %56 : vector<1x128xf32> to vector<8x128xf32>
    %60 = arith.mulf %58, %59 : vector<8x128xf32>
    %c0_29 = arith.constant 0 : index
    %c0_30 = arith.constant 0 : index
    %61 = vector.load %arg8[%c0_29, %c0_30] : memref<1x128xf32, #tpu.memory_space<vmem>>, vector<1x128xf32>
    %62 = vector.broadcast %61 : vector<1x128xf32> to vector<8x128xf32>
    %63 = arith.addf %60, %62 : vector<8x128xf32>
    %cst_31 = arith.constant 0.000000e+00 : f32
    %64 = vector.broadcast %cst_31 : f32 to vector<8x128xf32>
    %65 = arith.maximumf %63, %64 : vector<8x128xf32>
    %66 = arith.truncf %65 : vector<8x128xf32> to vector<8x128xbf16>
    %c0_32 = arith.constant 0 : index
    %c0_33 = arith.constant 0 : index
    %67 = vector.load %arg9[%c0_32, %c0_33] : memref<128x128xbf16, #tpu.memory_space<vmem>>, vector<128x128xbf16>
    %cst_34 = arith.constant dense<0.000000e+00> : vector<8x128xf32>
    %68 = tpu.matmul %66, %67, %cst_34 {dimension_numbers = #tpu.dot_dimension_numbers<[1], [0], [0], [1], [0, 0, 1, 1], [], []>} : vector<8x128xbf16>, vector<128x128xbf16>, vector<8x128xf32> -> vector<8x128xf32>
    %c0_35 = arith.constant 0 : index
    %c0_36 = arith.constant 0 : index
    %69 = vector.load %arg10[%c0_35, %c0_36] : memref<1x128xf32, #tpu.memory_space<vmem>>, vector<1x128xf32>
    %70 = vector.broadcast %69 : vector<1x128xf32> to vector<8x128xf32>
    %71 = arith.addf %68, %70 : vector<8x128xf32>
    %c0_37 = arith.constant 0 : index
    %c0_38 = arith.constant 0 : index
    %72 = vector.load %arg11[%c0_37, %c0_38] : memref<8x128xf32, #tpu.memory_space<vmem>>, vector<8x128xf32>
    tpu.vector_store %arg11[%c0_37, %c0_38], %71 {strides = array<i32>} : memref<8x128xf32, #tpu.memory_space<vmem>>, vector<8x128xf32>,
    return
  }
}

</mosaic_0001>

<llo_original>
// kernel: tpu_custom_call.1
$region0: #{tpu_custom_call.1}
  #allocation0 [shape = 'u32[]', space=smem, size = 0x4, offset = 0x4, fixed_abs, tag = 'smem constant byte address 0x4 - core index']
  #allocation1 [shape = 'u32[144,128]{1,0:T(1,128)}', space=vmem, size = 0x12000, scoped, tag = 'internal scratch']
  %s0 = inlined_call_operand.hbm [shape: bf16[8,128], index: 0, kind: input, shape index: {}]
  %s1 = inlined_call_operand.hbm [shape: bf16[128,128], index: 1, kind: input, shape index: {}]
  %s2 = inlined_call_operand.vmem [shape: f32[1,128], index: 2, kind: input, shape index: {}]
  %s3 = inlined_call_operand.vmem [shape: f32[1,128], index: 3, kind: input, shape index: {}]
  %s4 = inlined_call_operand.vmem [shape: f32[1,128], index: 4, kind: input, shape index: {}]
  %s5 = inlined_call_operand.hbm [shape: bf16[128,128], index: 5, kind: input, shape index: {}]
  %s6 = inlined_call_operand.vmem [shape: f32[1,128], index: 6, kind: input, shape index: {}]
  %s7 = inlined_call_operand.vmem [shape: f32[1,128], index: 7, kind: input, shape index: {}]
  %s8 = inlined_call_operand.vmem [shape: f32[1,128], index: 8, kind: input, shape index: {}]
  %s9 = inlined_call_operand.hbm [shape: bf16[128,128], index: 9, kind: input, shape index: {}]
  %s10 = inlined_call_operand.vmem [shape: f32[1,128], index: 10, kind: input, shape index: {}]
  %s11 = inlined_call_operand.hbm [shape: f32[8,128], index: 11, kind: output, shape index: {}]
  %s12 = sld [smem:[#allocation0]]
  $region70: #{tpu_custom_call.1} parent=0
    _
  %s14 = ssub.s32 1, %s12
  %s15 = scalar_select 0, %s14, %s12
  $region1: #{tpu_custom_call.1} parent=0
    #allocation2 [shape = 'u8[2048]{0}', space=vmem, size = 0x800, scoped, tag = 'input window, operand 0, single buffered']
    #allocation3 [shape = 's32[1]{0}', space=sflag, size = 0x4, scoped, tag = 'scoped memory for tpu_custom_call.1']
    #allocation4 [shape = 's32[1]{0}', space=sflag, size = 0x4, scoped, tag = 'scoped memory for tpu_custom_call.1']
    #allocation5 [shape = 'u8[32768]{0}', space=vmem, size = 0x8000, scoped, tag = 'input window, operand 1, single buffered']
    #allocation6 [shape = 's32[1]{0}', space=sflag, size = 0x4, scoped, tag = 'scoped memory for tpu_custom_call.1']
    #allocation7 [shape = 'u8[32768]{0}', space=vmem, size = 0x8000, scoped, tag = 'input window, operand 5, single buffered']
    #allocation8 [shape = 'u8[32768]{0}', space=vmem, size = 0x8000, scoped, tag = 'input window, operand 9, single buffered']
    #allocation9 [shape = 's32[1]{0}', space=sflag, size = 0x4, scoped, tag = 'scoped memory for tpu_custom_call.1']
    #allocation10 [shape = 'u8[4096]{0}', space=vmem, size = 0x1000, scoped, tag = 'output window, operand 0, single buffered']
    %16 = vsyncpa [#allocation3], 0
    %17 = vsyncpa [#allocation6], 0
    %18 = vsyncpa [#allocation9], 0
    %19 = vsyncpa [#allocation4], 0
    // Predicated region
    $region2: #{tpu_custom_call.1} parent=1 // pred_check
      _
    $region3: #{tpu_custom_call.1} parent=1 // pred_check_branch
      %21 = sbr.rel (0) target = $region5
    $region4: #{tpu_custom_call.1} parent=1 // pred_region
      %s23 = ssub.s32 64, 64
      %24 = vsyncadd [#allocation3], %s23
      %s26 = sshll.u32 [#allocation2], 4
      %s27 = int_to_ptr.vmem [resolvable:$true] %s26
      %29 = dma.hbm_to_vmem [thread:$0]  %s0, 64, %s27, [#allocation3]
    $region5: #{tpu_custom_call.1} parent=1 // pred_fallthru
      _
    // Predicated region
    $region6: #{tpu_custom_call.1} parent=1 // pred_check
      _
    $region7: #{tpu_custom_call.1} parent=1 // pred_check_branch
      %31 = sbr.rel (0) target = $region9
    $region8: #{tpu_custom_call.1} parent=1 // pred_region
      %s33 = ssub.s32 1024, 1024
      %34 = vsyncadd [#allocation6], %s33
      %s35 = sshll.u32 [#allocation5], 4
      %s36 = int_to_ptr.vmem [resolvable:$true] %s35
      %41 = dma.hbm_to_vmem [thread:$0]  %s1, 1024, %s36, [#allocation6], 64, 64, 4
    $region9: #{tpu_custom_call.1} parent=1 // pred_fallthru
      _
    // Predicated region
    $region10: #{tpu_custom_call.1} parent=1 // pred_check
      _
    $region11: #{tpu_custom_call.1} parent=1 // pred_check_branch
      %43 = sbr.rel (0) target = $region13
    $region12: #{tpu_custom_call.1} parent=1 // pred_region
      _
    $region13: #{tpu_custom_call.1} parent=1 // pred_fallthru
      _
    // Predicated region
    $region14: #{tpu_custom_call.1} parent=1 // pred_check
      _
    $region15: #{tpu_custom_call.1} parent=1 // pred_check_branch
      %45 = sbr.rel (0) target = $region17
    $region16: #{tpu_custom_call.1} parent=1 // pred_region
      _
    $region17: #{tpu_custom_call.1} parent=1 // pred_fallthru
      _
    // Predicated region
    $region18: #{tpu_custom_call.1} parent=1 // pred_check
      _
    $region19: #{tpu_custom_call.1} parent=1 // pred_check_branch
      %47 = sbr.rel (0) target = $region21
    $region20: #{tpu_custom_call.1} parent=1 // pred_region
      _
    $region21: #{tpu_custom_call.1} parent=1 // pred_fallthru
      _
    // Predicated region
    $region22: #{tpu_custom_call.1} parent=1 // pred_check
      _
    $region23: #{tpu_custom_call.1} parent=1 // pred_check_branch
      %49 = sbr.rel (0) target = $region25
    $region24: #{tpu_custom_call.1} parent=1 // pred_region
      %s51 = ssub.s32 1024, 1024
      %52 = vsyncadd [#allocation6], %s51
      %s53 = sshll.u32 [#allocation7], 4
      %s54 = int_to_ptr.vmem [resolvable:$true] %s53
      %59 = dma.hbm_to_vmem [thread:$0]  %s5, 1024, %s54, [#allocation6], 64, 64, 4
    $region25: #{tpu_custom_call.1} parent=1 // pred_fallthru
      _
    // Predicated region
    $region26: #{tpu_custom_call.1} parent=1 // pred_check
      _
    $region27: #{tpu_custom_call.1} parent=1 // pred_check_branch
      %61 = sbr.rel (0) target = $region29
    $region28: #{tpu_custom_call.1} parent=1 // pred_region
      _
    $region29: #{tpu_custom_call.1} parent=1 // pred_fallthru
      _
    // Predicated region
    $region30: #{tpu_custom_call.1} parent=1 // pred_check
      _
    $region31: #{tpu_custom_call.1} parent=1 // pred_check_branch
      %63 = sbr.rel (0) target = $region33
    $region32: #{tpu_custom_call.1} parent=1 // pred_region
      _
    $region33: #{tpu_custom_call.1} parent=1 // pred_fallthru
      _
    // Predicated region
    $region34: #{tpu_custom_call.1} parent=1 // pred_check
      _
    $region35: #{tpu_custom_call.1} parent=1 // pred_check_branch
      %65 = sbr.rel (0) target = $region37
    $region36: #{tpu_custom_call.1} parent=1 // pred_region
      _
    $region37: #{tpu_custom_call.1} parent=1 // pred_fallthru
      _
    // Predicated region
    $region38: #{tpu_custom_call.1} parent=1 // pred_check
      _
    $region39: #{tpu_custom_call.1} parent=1 // pred_check_branch
      %67 = sbr.rel (0) target = $region41
    $region40: #{tpu_custom_call.1} parent=1 // pred_region
      %s69 = ssub.s32 1024, 1024
      %70 = vsyncadd [#allocation9], %s69
      %s71 = sshll.u32 [#allocation8], 4
      %s72 = int_to_ptr.vmem [resolvable:$true] %s71
      %77 = dma.hbm_to_vmem [thread:$0]  %s9, 1024, %s72, [#allocation9], 64, 64, 4
    $region41: #{tpu_custom_call.1} parent=1 // pred_fallthru
      _
    // Predicated region
    $region42: #{tpu_custom_call.1} parent=1 // pred_check
      _
    $region43: #{tpu_custom_call.1} parent=1 // pred_check_branch
      %79 = sbr.rel (0) target = $region45
    $region44: #{tpu_custom_call.1} parent=1 // pred_region
      _
    $region45: #{tpu_custom_call.1} parent=1 // pred_fallthru
      _
    // Predicated region
    $region46: #{tpu_custom_call.1} parent=1 // pred_check
      _
    $region47: #{tpu_custom_call.1} parent=1 // pred_check_branch
      %81 = sbr.rel (0) target = $region49
    $region48: #{tpu_custom_call.1} parent=1 // pred_region
      %82 = dma.done [#allocation3], 64
    $region49: #{tpu_custom_call.1} parent=1 // pred_fallthru
      _
    // Predicated region
    $region50: #{tpu_custom_call.1} parent=1 // pred_check
      _
    $region51: #{tpu_custom_call.1} parent=1 // pred_check_branch
      %84 = sbr.rel (0) target = $region53
    $region52: #{tpu_custom_call.1} parent=1 // pred_region
      %85 = dma.done [#allocation6], 1024
    $region53: #{tpu_custom_call.1} parent=1 // pred_fallthru
      _
    // Predicated region
    $region54: #{tpu_custom_call.1} parent=1 // pred_check
      _
    $region55: #{tpu_custom_call.1} parent=1 // pred_check_branch
      %87 = sbr.rel (0) target = $region57
    $region56: #{tpu_custom_call.1} parent=1 // pred_region
      %88 = dma.done [#allocation6], 1024
    $region57: #{tpu_custom_call.1} parent=1 // pred_fallthru
      _
    // Predicated region
    $region58: #{tpu_custom_call.1} parent=1 // pred_check
      _
    $region59: #{tpu_custom_call.1} parent=1 // pred_check_branch
      %90 = sbr.rel (0) target = $region61
    $region60: #{tpu_custom_call.1} parent=1 // pred_region
      %91 = dma.done [#allocation9], 1024
    $region61: #{tpu_custom_call.1} parent=1 // pred_fallthru
      _
    %v93 = vld [vmem:[#allocation2] sm:$0xf]
    %v94 = vld [vmem:[#allocation5] sm:$0xf]
    %v95 = vld [vmem:[#allocation5 + $0x4] sm:$0xf]
    %v96 = vld [vmem:[#allocation5 + $0x8] sm:$0xf]
    %v97 = vld [vmem:[#allocation5 + $0xc] sm:$0xf]
    %v98 = vld [vmem:[#allocation5 + $0x10] sm:$0xf]
    %v99 = vld [vmem:[#allocation5 + $0x14] sm:$0xf]
    %v100 = vld [vmem:[#allocation5 + $0x18] sm:$0xf]
    %v101 = vld [vmem:[#allocation5 + $0x1c] sm:$0xf]
    %v102 = vld [vmem:[#allocation5 + $0x20] sm:$0xf]
    %v103 = vld [vmem:[#allocation5 + $0x24] sm:$0xf]
    %v104 = vld [vmem:[#allocation5 + $0x28] sm:$0xf]
    %v105 = vld [vmem:[#allocation5 + $0x2c] sm:$0xf]
    %v106 = vld [vmem:[#allocation5 + $0x30] sm:$0xf]
    %v107 = vld [vmem:[#allocation5 + $0x34] sm:$0xf]
    %v108 = vld [vmem:[#allocation5 + $0x38] sm:$0xf]
    %v109 = vld [vmem:[#allocation5 + $0x3c] sm:$0xf]
    %v110 = vld [vmem:[%s2] sm:$0x1]
    %v112 = vlaneseq
    %v113 = vshrl.u32 %v112, 7
    %v114 = vsub.s32 0, %v113
    %v115 = vrot.slane %v110, %v114
    %v133 = vunpack.c.l.b16 %v94
    %v134 = vunpack.c.l.b16 %v95
    %v135 = vunpack.c.l.b16 %v96
    %v136 = vunpack.c.l.b16 %v97
    %v137 = vunpack.c.l.b16 %v98
    %v138 = vunpack.c.l.b16 %v99
    %v139 = vunpack.c.l.b16 %v100
    %v140 = vunpack.c.l.b16 %v101
    %v141 = vunpack.c.l.b16 %v102
    %v142 = vunpack.c.l.b16 %v103
    %v143 = vunpack.c.l.b16 %v104
    %v144 = vunpack.c.l.b16 %v105
    %v145 = vunpack.c.l.b16 %v106
    %v146 = vunpack.c.l.b16 %v107
    %v147 = vunpack.c.l.b16 %v108
    %v148 = vunpack.c.l.b16 %v109
    %v149 = vpack.c.b16 %v134, %v133
    %v150 = vpack.c.b16 %v136, %v135
    %v151 = vpack.c.b16 %v138, %v137
    %v152 = vpack.c.b16 %v140, %v139
    %v153 = vpack.c.b16 %v142, %v141
    %v154 = vpack.c.b16 %v144, %v143
    %v155 = vpack.c.b16 %v146, %v145
    %v156 = vpack.c.b16 %v148, %v147
    %165 = vmatprep.subr.bf16.mxu0 0
    %166 = vmatpush1.bf16.msra.mxu0 %v149
    %167 = vmatprep.subr.bf16.mxu0 0
    %168 = vmatpush1.bf16.msra.mxu0 %v150
    %169 = vmatprep.subr.bf16.mxu0 0
    %170 = vmatpush1.bf16.msra.mxu0 %v151
    %171 = vmatprep.subr.bf16.mxu0 0
    %172 = vmatpush1.bf16.msra.mxu0 %v152
    %173 = vmatprep.subr.bf16.mxu0 0
    %174 = vmatpush1.bf16.msra.mxu0 %v153
    %175 = vmatprep.subr.bf16.mxu0 0
    %176 = vmatpush1.bf16.msra.mxu0 %v154
    %177 = vmatprep.subr.bf16.mxu0 0
    %178 = vmatpush1.bf16.msra.mxu0 %v155
    %179 = vmatprep.subr.bf16.mxu0 0
    %180 = vmatpush1.bf16.msra.mxu0 %v156
    %181 = vmatprep.subr.bf16.mxu0 0
    %182 = vmatpush1.bf16.msra.mxu0 0
    %183 = vmatprep.subr.bf16.mxu0 0
    %184 = vmatpush1.bf16.msra.mxu0 0
    %185 = vmatprep.subr.bf16.mxu0 0
    %186 = vmatpush1.bf16.msra.mxu0 0
    %187 = vmatprep.subr.bf16.mxu0 0
    %188 = vmatpush1.bf16.msra.mxu0 0
    %189 = vmatprep.subr.bf16.mxu0 0
    %190 = vmatpush1.bf16.msra.mxu0 0
    %191 = vmatprep.subr.bf16.mxu0 0
    %192 = vmatpush1.bf16.msra.mxu0 0
    %193 = vmatprep.subr.bf16.mxu0 0
    %194 = vmatpush1.bf16.msra.mxu0 0
    %195 = vmatprep.subr.bf16.mxu0 0
    %196 = vmatpush1.bf16.msra.mxu0 0
    %197 = vmatprep.mubr.bf16.mxu0 0
    %198 = vmatmul.mubr.bf16.gmra.mrb[0].mxu0 %v93
    %v199 = vpop.f32.mrb[0].mxu0
    %v200 = vadd.f32 %v115, %v199
    %v201 = vpop.f32.mrb[0].mxu0
    %v202 = vpop.f32.mrb[0].mxu0
    %v203 = vpop.f32.mrb[0].mxu0
    %204 = vdwg.mxu0
    %v205 = vrot.slane %v200, 4
    %v206 = vadd.f32 %v200, %v205
    %v207 = vrot.slane %v206, 2
    %v208 = vadd.f32 %v206, %v207
    %v209 = vrot.slane %v208, 1
    %v210 = vadd.f32 %v208, %v209
    %v211 = vmul.f32 %v200, %v200
    %v212 = vrot.slane %v211, 4
    %v213 = vadd.f32 %v211, %v212
    %v214 = vrot.slane %v213, 2
    %v215 = vadd.f32 %v213, %v214
    %v216 = vrot.slane %v215, 1
    %v217 = vadd.f32 %v215, %v216
    %v218 = vmul.f32 %v210, 0.125
    %v219 = vmul.f32 %v217, 0.125
    %v220 = vmul.f32 %v218, %v218
    %v221 = vsub.f32 %v219, %v220
    %v222 = vmax.f32 %v221, 0.0
    %v223 = vld [vmem:[%s3] sm:$0x1]
    %v224 = vadd.f32 %v222, 1e-05
    %v225 = vrsqrt.pop %v224
    %v226 = vmul.f32 %v223, %v225
    %v227 = vsub.f32 %v200, %v218
    %v229 = vlaneseq
    %v230 = vshrl.u32 %v229, 7
    %v231 = vsub.s32 0, %v230
    %v232 = vrot.slane %v226, %v231
    %v234 = vmul.f32 %v227, %v232
    %v235 = vld [vmem:[%s4] sm:$0x1]
    %v237 = vlaneseq
    %v238 = vshrl.u32 %v237, 7
    %v239 = vsub.s32 0, %v238
    %v240 = vrot.slane %v235, %v239
    %v242 = vadd.f32 %v234, %v240
    %v243 = vmax.f32 %v242, 0.0
    %v244 = vpack.c.bf16 %v243, %v243
    %v245 = vld [vmem:[#allocation7] sm:$0xf]
    %v246 = vld [vmem:[#allocation7 + $0x4] sm:$0xf]
    %v247 = vld [vmem:[#allocation7 + $0x8] sm:$0xf]
    %v248 = vld [vmem:[#allocation7 + $0xc] sm:$0xf]
    %v249 = vld [vmem:[#allocation7 + $0x10] sm:$0xf]
    %v250 = vld [vmem:[#allocation7 + $0x14] sm:$0xf]
    %v251 = vld [vmem:[#allocation7 + $0x18] sm:$0xf]
    %v252 = vld [vmem:[#allocation7 + $0x1c] sm:$0xf]
    %v253 = vld [vmem:[#allocation7 + $0x20] sm:$0xf]
    %v254 = vld [vmem:[#allocation7 + $0x24] sm:$0xf]
    %v255 = vld [vmem:[#allocation7 + $0x28] sm:$0xf]
    %v256 = vld [vmem:[#allocation7 + $0x2c] sm:$0xf]
    %v257 = vld [vmem:[#allocation7 + $0x30] sm:$0xf]
    %v258 = vld [vmem:[#allocation7 + $0x34] sm:$0xf]
    %v259 = vld [vmem:[#allocation7 + $0x38] sm:$0xf]
    %v260 = vld [vmem:[#allocation7 + $0x3c] sm:$0xf]
    %v261 = vld [vmem:[%s6] sm:$0x1]
    %v263 = vlaneseq
    %v264 = vshrl.u32 %v263, 7
    %v265 = vsub.s32 0, %v264
    %v266 = vrot.slane %v261, %v265
    %v284 = vunpack.c.l.b16 %v245
    %v285 = vunpack.c.l.b16 %v246
    %v286 = vunpack.c.l.b16 %v247
    %v287 = vunpack.c.l.b16 %v248
    %v288 = vunpack.c.l.b16 %v249
    %v289 = vunpack.c.l.b16 %v250
    %v290 = vunpack.c.l.b16 %v251
    %v291 = vunpack.c.l.b16 %v252
    %v292 = vunpack.c.l.b16 %v253
    %v293 = vunpack.c.l.b16 %v254
    %v294 = vunpack.c.l.b16 %v255
    %v295 = vunpack.c.l.b16 %v256
    %v296 = vunpack.c.l.b16 %v257
    %v297 = vunpack.c.l.b16 %v258
    %v298 = vunpack.c.l.b16 %v259
    %v299 = vunpack.c.l.b16 %v260
    %v300 = vpack.c.b16 %v285, %v284
    %v301 = vpack.c.b16 %v287, %v286
    %v302 = vpack.c.b16 %v289, %v288
    %v303 = vpack.c.b16 %v291, %v290
    %v304 = vpack.c.b16 %v293, %v292
    %v305 = vpack.c.b16 %v295, %v294
    %v306 = vpack.c.b16 %v297, %v296
    %v307 = vpack.c.b16 %v299, %v298
    %316 = vmatprep.subr.bf16.mxu0 0
    %317 = vmatpush1.bf16.msra.mxu0 %v300
    %318 = vmatprep.subr.bf16.mxu0 0
    %319 = vmatpush1.bf16.msra.mxu0 %v301
    %320 = vmatprep.subr.bf16.mxu0 0
    %321 = vmatpush1.bf16.msra.mxu0 %v302
    %322 = vmatprep.subr.bf16.mxu0 0
    %323 = vmatpush1.bf16.msra.mxu0 %v303
    %324 = vmatprep.subr.bf16.mxu0 0
    %325 = vmatpush1.bf16.msra.mxu0 %v304
    %326 = vmatprep.subr.bf16.mxu0 0
    %327 = vmatpush1.bf16.msra.mxu0 %v305
    %328 = vmatprep.subr.bf16.mxu0 0
    %329 = vmatpush1.bf16.msra.mxu0 %v306
    %330 = vmatprep.subr.bf16.mxu0 0
    %331 = vmatpush1.bf16.msra.mxu0 %v307
    %332 = vmatprep.subr.bf16.mxu0 0
    %333 = vmatpush1.bf16.msra.mxu0 0
    %334 = vmatprep.subr.bf16.mxu0 0
    %335 = vmatpush1.bf16.msra.mxu0 0
    %336 = vmatprep.subr.bf16.mxu0 0
    %337 = vmatpush1.bf16.msra.mxu0 0
    %338 = vmatprep.subr.bf16.mxu0 0
    %339 = vmatpush1.bf16.msra.mxu0 0
    %340 = vmatprep.subr.bf16.mxu0 0
    %341 = vmatpush1.bf16.msra.mxu0 0
    %342 = vmatprep.subr.bf16.mxu0 0
    %343 = vmatpush1.bf16.msra.mxu0 0
    %344 = vmatprep.subr.bf16.mxu0 0
    %345 = vmatpush1.bf16.msra.mxu0 0
    %346 = vmatprep.subr.bf16.mxu0 0
    %347 = vmatpush1.bf16.msra.mxu0 0
    %348 = vmatprep.mubr.bf16.mxu0 0
    %349 = vmatmul.mubr.bf16.gmra.mrb[0].mxu0 %v244
    %v350 = vpop.f32.mrb[0].mxu0
    %v351 = vadd.f32 %v266, %v350
    %v352 = vpop.f32.mrb[0].mxu0
    %v353 = vpop.f32.mrb[0].mxu0
    %v354 = vpop.f32.mrb[0].mxu0
    %355 = vdwg.mxu0
    %v356 = vrot.slane %v351, 4
    %v357 = vadd.f32 %v351, %v356
    %v358 = vrot.slane %v357, 2
    %v359 = vadd.f32 %v357, %v358
    %v360 = vrot.slane %v359, 1
    %v361 = vadd.f32 %v359, %v360
    %v362 = vmul.f32 %v351, %v351
    %v363 = vrot.slane %v362, 4
    %v364 = vadd.f32 %v362, %v363
    %v365 = vrot.slane %v364, 2
    %v366 = vadd.f32 %v364, %v365
    %v367 = vrot.slane %v366, 1
    %v368 = vadd.f32 %v366, %v367
    %v369 = vmul.f32 %v361, 0.125
    %v370 = vmul.f32 %v368, 0.125
    %v371 = vmul.f32 %v369, %v369
    %v372 = vsub.f32 %v370, %v371
    %v373 = vmax.f32 %v372, 0.0
    %v374 = vld [vmem:[%s7] sm:$0x1]
    %v375 = vadd.f32 %v373, 1e-05
    %v376 = vrsqrt.pop %v375
    %v377 = vmul.f32 %v374, %v376
    %v378 = vsub.f32 %v351, %v369
    %v380 = vlaneseq
    %v381 = vshrl.u32 %v380, 7
    %v382 = vsub.s32 0, %v381
    %v383 = vrot.slane %v377, %v382
    %v385 = vmul.f32 %v378, %v383
    %v386 = vld [vmem:[%s8] sm:$0x1]
    %v388 = vlaneseq
    %v389 = vshrl.u32 %v388, 7
    %v390 = vsub.s32 0, %v389
    %v391 = vrot.slane %v386, %v390
    %v393 = vadd.f32 %v385, %v391
    %v394 = vmax.f32 %v393, 0.0
    %v395 = vpack.c.bf16 %v394, %v394
    %v396 = vld [vmem:[#allocation8] sm:$0xf]
    %v397 = vld [vmem:[#allocation8 + $0x4] sm:$0xf]
    %v398 = vld [vmem:[#allocation8 + $0x8] sm:$0xf]
    %v399 = vld [vmem:[#allocation8 + $0xc] sm:$0xf]
    %v400 = vld [vmem:[#allocation8 + $0x10] sm:$0xf]
    %v401 = vld [vmem:[#allocation8 + $0x14] sm:$0xf]
    %v402 = vld [vmem:[#allocation8 + $0x18] sm:$0xf]
    %v403 = vld [vmem:[#allocation8 + $0x1c] sm:$0xf]
    %v404 = vld [vmem:[#allocation8 + $0x20] sm:$0xf]
    %v405 = vld [vmem:[#allocation8 + $0x24] sm:$0xf]
    %v406 = vld [vmem:[#allocation8 + $0x28] sm:$0xf]
    %v407 = vld [vmem:[#allocation8 + $0x2c] sm:$0xf]
    %v408 = vld [vmem:[#allocation8 + $0x30] sm:$0xf]
    %v409 = vld [vmem:[#allocation8 + $0x34] sm:$0xf]
    %v410 = vld [vmem:[#allocation8 + $0x38] sm:$0xf]
    %v411 = vld [vmem:[#allocation8 + $0x3c] sm:$0xf]
    %v412 = vld [vmem:[%s10] sm:$0x1]
    %v414 = vlaneseq
    %v415 = vshrl.u32 %v414, 7
    %v416 = vsub.s32 0, %v415
    %v417 = vrot.slane %v412, %v416
    %v435 = vunpack.c.l.b16 %v396
    %v436 = vunpack.c.l.b16 %v397
    %v437 = vunpack.c.l.b16 %v398
    %v438 = vunpack.c.l.b16 %v399
    %v439 = vunpack.c.l.b16 %v400
    %v440 = vunpack.c.l.b16 %v401
    %v441 = vunpack.c.l.b16 %v402
    %v442 = vunpack.c.l.b16 %v403
    %v443 = vunpack.c.l.b16 %v404
    %v444 = vunpack.c.l.b16 %v405
    %v445 = vunpack.c.l.b16 %v406
    %v446 = vunpack.c.l.b16 %v407
    %v447 = vunpack.c.l.b16 %v408
    %v448 = vunpack.c.l.b16 %v409
    %v449 = vunpack.c.l.b16 %v410
    %v450 = vunpack.c.l.b16 %v411
    %v451 = vpack.c.b16 %v436, %v435
    %v452 = vpack.c.b16 %v438, %v437
    %v453 = vpack.c.b16 %v440, %v439
    %v454 = vpack.c.b16 %v442, %v441
    %v455 = vpack.c.b16 %v444, %v443
    %v456 = vpack.c.b16 %v446, %v445
    %v457 = vpack.c.b16 %v448, %v447
    %v458 = vpack.c.b16 %v450, %v449
    %467 = vmatprep.subr.bf16.mxu0 0
    %468 = vmatpush1.bf16.msra.mxu0 %v451
    %469 = vmatprep.subr.bf16.mxu0 0
    %470 = vmatpush1.bf16.msra.mxu0 %v452
    %471 = vmatprep.subr.bf16.mxu0 0
    %472 = vmatpush1.bf16.msra.mxu0 %v453
    %473 = vmatprep.subr.bf16.mxu0 0
    %474 = vmatpush1.bf16.msra.mxu0 %v454
    %475 = vmatprep.subr.bf16.mxu0 0
    %476 = vmatpush1.bf16.msra.mxu0 %v455
    %477 = vmatprep.subr.bf16.mxu0 0
    %478 = vmatpush1.bf16.msra.mxu0 %v456
    %479 = vmatprep.subr.bf16.mxu0 0
    %480 = vmatpush1.bf16.msra.mxu0 %v457
    %481 = vmatprep.subr.bf16.mxu0 0
    %482 = vmatpush1.bf16.msra.mxu0 %v458
    %483 = vmatprep.subr.bf16.mxu0 0
    %484 = vmatpush1.bf16.msra.mxu0 0
    %485 = vmatprep.subr.bf16.mxu0 0
    %486 = vmatpush1.bf16.msra.mxu0 0
    %487 = vmatprep.subr.bf16.mxu0 0
    %488 = vmatpush1.bf16.msra.mxu0 0
    %489 = vmatprep.subr.bf16.mxu0 0
    %490 = vmatpush1.bf16.msra.mxu0 0
    %491 = vmatprep.subr.bf16.mxu0 0
    %492 = vmatpush1.bf16.msra.mxu0 0
    %493 = vmatprep.subr.bf16.mxu0 0
    %494 = vmatpush1.bf16.msra.mxu0 0
    %495 = vmatprep.subr.bf16.mxu0 0
    %496 = vmatpush1.bf16.msra.mxu0 0
    %497 = vmatprep.subr.bf16.mxu0 0
    %498 = vmatpush1.bf16.msra.mxu0 0
    %499 = vmatprep.mubr.bf16.mxu0 0
    %500 = vmatmul.mubr.bf16.gmra.mrb[0].mxu0 %v395
    %v501 = vpop.f32.mrb[0].mxu0
    %v502 = vadd.f32 %v417, %v501
    %v503 = vpop.f32.mrb[0].mxu0
    %v504 = vpop.f32.mrb[0].mxu0
    %v505 = vpop.f32.mrb[0].mxu0
    %506 = vdwg.mxu0
    %507 = vst [vmem:[#allocation10] sm:$0xff] %v502
    // Predicated region
    $region62: #{tpu_custom_call.1} parent=1 // pred_check
      _
    $region63: #{tpu_custom_call.1} parent=1 // pred_check_branch
      %509 = sbr.rel (0) target = $region65
    $region64: #{tpu_custom_call.1} parent=1 // pred_region
      %s511 = ssub.s32 128, 128
      %512 = vsyncadd [#allocation4], %s511
      %s514 = sshll.u32 [#allocation10], 4
      %s515 = int_to_ptr.vmem [resolvable:$true] %s514
      %517 = dma.vmem_to_hbm [thread:$0]  %s515, 128, %s11, [#allocation4]
    $region65: #{tpu_custom_call.1} parent=1 // pred_fallthru
      _
    // Predicated region
    $region66: #{tpu_custom_call.1} parent=1 // pred_check
      _
    $region67: #{tpu_custom_call.1} parent=1 // pred_check_branch
      %519 = sbr.rel (0) target = $region69
    $region68: #{tpu_custom_call.1} parent=1 // pred_region
      %520 = dma.done [#allocation4], 128
    $region69: #{tpu_custom_call.1} parent=1 // pred_fallthru
      _
    %521 = vsyncpa [#allocation3], 1
    %522 = vsyncpa [#allocation6], 1
    %523 = vsyncpa [#allocation9], 1
    %524 = vsyncpa [#allocation4], 1

</llo_original>
